<compile_context>
chip_gen: v6e
topology: v6e:2x2x1
jax: 0.10.0
libtpu: 0.0.40
codegen_flags: <defaults>
</compile_context>

<pallas_src>
import functools

import jax
import jax.numpy as jnp
from jax import lax
from jax.experimental import pallas as pl
from jax.experimental.pallas import tpu as pltpu


def _mlp2_kernel(x_ref, w1_ref, w2_ref, yt_ref):
    # x_ref : [tb, in_features] f32 (natural layout)
    # w1_ref: [hidden, in_features] f32   w2_ref: [out_features, hidden] f32
    # yt_ref: [out_features, tb] f32 (lane-dense output tile)
    x_bf = x_ref[...].astype(jnp.bfloat16)    # in-kernel cast: free VPU work
    w1_bf = w1_ref[...].astype(jnp.bfloat16)
    w2_bf = w2_ref[...].astype(jnp.bfloat16)

    # hT[hidden, tb] = W1 @ x^T : contract both operands' last dim (in_features).
    ht = lax.dot_general(
        w1_bf, x_bf,
        dimension_numbers=(((1,), (1,)), ((), ())),
        preferred_element_type=jnp.float32)
    ht = jnp.maximum(ht, 0.0)                 # ReLU in f32 on the VPU

    # yT[out_features, tb] = W2 @ hT  (second GEMM is <5% of FLOPs).
    yt = jnp.dot(w2_bf, ht.astype(jnp.bfloat16),
                 preferred_element_type=jnp.float32)
    yt_ref[...] = yt.astype(yt_ref.dtype)


def _choose_tile(B, tile_b_cap):
    """Largest 128-multiple tile <= cap that divides B with >= 2 grid steps."""
    if B % 128 == 0 and B >= 256:
        tb = 128
        while (tb * 2 <= tile_b_cap and B % (tb * 2) == 0
               and (B // (tb * 2)) >= 2):
            tb *= 2
        return tb
    # Single full-extent block (masked output stores if B % 128 != 0).
    return B


@functools.partial(jax.jit, static_argnames=("tile_b",))
def mlp2_forward(x, w1, w2, *, tile_b=512):
    """Fused forward pass y = relu(x @ W1^T) @ W2^T.

    Args:
      x:  [B, in_features] float32
      w1: [hidden, in_features] float32  (PyTorch nn.Linear layout)
      w2: [out_features, hidden] float32

    Returns:
      y: [B, out_features] float32
    """
    B, in_features = x.shape
    hidden = w1.shape[0]
    out_features = w2.shape[0]

    tb = _choose_tile(B, tile_b)
    grid = (B // tb if B % tb == 0 else 1,)

    flops = 2 * B * in_features * hidden + 2 * B * hidden * out_features
    bytes_accessed = (B * in_features * 4          # x (f32, natural layout)
                      + hidden * in_features * 4   # W1 (f32, read once)
                      + out_features * hidden * 4  # W2 (f32, read once)
                      + out_features * B * 4)      # y^T (f32)

    yt = pl.pallas_call(
        _mlp2_kernel,
        out_shape=jax.ShapeDtypeStruct((out_features, B), jnp.float32),
        grid_spec=pl.GridSpec(
            grid=grid,
            in_specs=[
                pl.BlockSpec((tb, in_features), lambda i: (i, 0)),      # x tile
                pl.BlockSpec((hidden, in_features), lambda i: (0, 0)),  # W1 resident
                pl.BlockSpec((out_features, hidden), lambda i: (0, 0)), # W2 resident
            ],
            out_specs=pl.BlockSpec((out_features, tb), lambda i: (0, i)),
        ),
        compiler_params=pltpu.CompilerParams(
            dimension_semantics=("parallel",),
        ),
        cost_estimate=pl.CostEstimate(
            flops=flops, transcendentals=0, bytes_accessed=bytes_accessed),
    )(x, w1, w2)

    # [out_features, B] -> [B, out_features]; output is tiny (32 cols), so this
    # transpose costs ~1/25 of the x read it replaced on the input side.
    return yt.T.astype(x.dtype)


if __name__ == "__main__":
    # Module defaults: in_features=768, hidden=64, out_features=32, bias=False, sigma=1
    in_features, hidden, out_features = 768, 64, 32
    batch = 256          # exercises batch tiling: grid=(2,) with tb=128
    sigma = 1.0

    key = jax.random.PRNGKey(0)
    kx, k1, k2 = jax.random.split(key, 3)

    x = jax.random.normal(kx, (batch, in_features), dtype=jnp.float32)
    # Deterministic N(0, sigma) init matching torch.nn.init.normal_
    w1 = sigma * jax.random.normal(k1, (hidden, in_features), dtype=jnp.float32)
    w2 = sigma * jax.random.normal(k2, (out_features, hidden), dtype=jnp.float32)

    y = jax.block_until_ready(mlp2_forward(x, w1, w2))

    # Reference with the same bf16-input / f32-accumulation numerics as the kernel.
    x_bf = x.astype(jnp.bfloat16)
    w1_bf = w1.astype(jnp.bfloat16)
    w2_bf = w2.astype(jnp.bfloat16)
    h_ref = jnp.maximum(
        jnp.dot(x_bf, w1_bf.T, preferred_element_type=jnp.float32), 0.0)
    y_ref = jnp.dot(h_ref.astype(jnp.bfloat16), w2_bf.T,
                    preferred_element_type=jnp.float32)

    assert y.shape == (batch, out_features)
    assert jnp.allclose(y, y_ref, atol=5e-2, rtol=5e-2), \
        float(jnp.max(jnp.abs(y - y_ref)))

    print("KERNEL_OK")
</pallas_src>

<mosaic_0001>
module attributes {stable_mosaic.version = 11 : i64} {
  func.func @_mlp2_kernel(%arg0: i32, %arg1: memref<128x768xf32, #tpu.memory_space<vmem>>, %arg2: memref<64x768xf32, #tpu.memory_space<vmem>>, %arg3: memref<32x64xf32, #tpu.memory_space<vmem>>, %arg4: memref<32x128xf32, #tpu.memory_space<vmem>>) attributes {dimension_semantics = [#tpu.dimension_semantics<parallel>], iteration_bounds = array<i64: 2>, scalar_prefetch = 0 : i64, scratch_operands = 0 : i64, tpu.core_type = #tpu.core_type<tc>, window_params = [{transform_indices = @transform_0, window_bounds = array<i64: 128, 768>}, {pipeline_mode = #tpu.pipeline_mode<synchronous>, transform_indices = @transform_1, window_bounds = array<i64: 64, 768>}, {pipeline_mode = #tpu.pipeline_mode<synchronous>, transform_indices = @transform_2, window_bounds = array<i64: 32, 64>}, {transform_indices = @transform_3, window_bounds = array<i64: 32, 128>}]} {
    %c0 = arith.constant 0 : index
    %c0_0 = arith.constant 0 : index
    %0 = vector.load %arg1[%c0, %c0_0] : memref<128x768xf32, #tpu.memory_space<vmem>>, vector<128x768xf32>
    %1 = arith.truncf %0 : vector<128x768xf32> to vector<128x768xbf16>
    %c0_1 = arith.constant 0 : index
    %c0_2 = arith.constant 0 : index
    %2 = vector.load %arg2[%c0_1, %c0_2] : memref<64x768xf32, #tpu.memory_space<vmem>>, vector<64x768xf32>
    %3 = arith.truncf %2 : vector<64x768xf32> to vector<64x768xbf16>
    %c0_3 = arith.constant 0 : index
    %c0_4 = arith.constant 0 : index
    %4 = vector.load %arg3[%c0_3, %c0_4] : memref<32x64xf32, #tpu.memory_space<vmem>>, vector<32x64xf32>
    %5 = arith.truncf %4 : vector<32x64xf32> to vector<32x64xbf16>
    %cst = arith.constant dense<0.000000e+00> : vector<64x128xf32>
    %6 = tpu.matmul %3, %1, %cst {dimension_numbers = #tpu.dot_dimension_numbers<[1], [1], [0], [0], [0, 0, 1, 0], [], []>} : vector<64x768xbf16>, vector<128x768xbf16>, vector<64x128xf32> -> vector<64x128xf32>
    %cst_5 = arith.constant 0.000000e+00 : f32
    %7 = vector.broadcast %cst_5 : f32 to vector<64x128xf32>
    %8 = arith.maximumf %6, %7 : vector<64x128xf32>
    %9 = arith.truncf %8 : vector<64x128xf32> to vector<64x128xbf16>
    %cst_6 = arith.constant dense<0.000000e+00> : vector<32x128xf32>
    %10 = tpu.matmul %5, %9, %cst_6 {dimension_numbers = #tpu.dot_dimension_numbers<[1], [0], [0], [1], [0, 0, 1, 1], [], []>} : vector<32x64xbf16>, vector<64x128xbf16>, vector<32x128xf32> -> vector<32x128xf32>
    %c0_7 = arith.constant 0 : index
    %c0_8 = arith.constant 0 : index
    %11 = vector.load %arg4[%c0_7, %c0_8] : memref<32x128xf32, #tpu.memory_space<vmem>>, vector<32x128xf32>
    tpu.vector_store %arg4[%c0_7, %c0_8], %10 {strides = array<i32>} : memref<32x128xf32, #tpu.memory_space<vmem>>, vector<32x128xf32>,
    return
  }
  func.func @transform_0(%arg0: i32) -> (i32, i32) {
    %c0_i32 = arith.constant 0 : i32
    %c0_i32_0 = arith.constant 0 : i32
    return %arg0, %c0_i32 : i32, i32
  }
  func.func @transform_1(%arg0: i32) -> (i32, i32) {
    %c0_i32 = arith.constant 0 : i32
    %c0_i32_0 = arith.constant 0 : i32
    %c0_i32_1 = arith.constant 0 : i32
    return %c0_i32, %c0_i32_0 : i32, i32
  }
  func.func @transform_2(%arg0: i32) -> (i32, i32) {
    %c0_i32 = arith.constant 0 : i32
    %c0_i32_0 = arith.constant 0 : i32
    %c0_i32_1 = arith.constant 0 : i32
    return %c0_i32, %c0_i32_0 : i32, i32
  }
  func.func @transform_3(%arg0: i32) -> (i32, i32) {
    %c0_i32 = arith.constant 0 : i32
    %c0_i32_0 = arith.constant 0 : i32
    return %c0_i32, %arg0 : i32, i32
  }
}

</mosaic_0001>

<llo_original>
// kernel: mlp2_forward.1
$region0: #{mlp2_forward.1}
  #allocation0 [shape = 'u32[]', space=smem, size = 0x4, offset = 0x4, fixed_abs, tag = 'smem constant byte address 0x4 - core index']
  #allocation1 [shape = 'u32[144,128]{1,0:T(1,128)}', space=vmem, size = 0x12000, scoped, tag = 'internal scratch']
  %s0 = inlined_call_operand.hbm [shape: f32[256,768], index: 0, kind: input, shape index: {}]
  %s1 = inlined_call_operand.hbm [shape: f32[64,768], index: 1, kind: input, shape index: {}]
  %s2 = inlined_call_operand.hbm [shape: f32[32,64], index: 2, kind: input, shape index: {}]
  %s3 = inlined_call_operand.hbm [shape: f32[32,256], index: 3, kind: output, shape index: {}]
  %s4 = sld [smem:[#allocation0]]
  $region57: #{mlp2_forward.1} parent=0
    _
  %s6 = ssub.s32 1, %s4
  %s7 = scalar_select 0, %s6, %s4
  $region1: #{mlp2_forward.1} parent=0
    #allocation2 [shape = 'u8[786432]{0}', space=vmem, size = 0xc0000, scoped, tag = 'input window, operand 0']
    #allocation3 [shape = 's32[2]{0}', space=sflag, size = 0x8, scoped, tag = 'scoped memory for mlp2_forward.1']
    #allocation4 [shape = 's32[2]{0}', space=sflag, size = 0x8, scoped, tag = 'scoped memory for mlp2_forward.1']
    #allocation5 [shape = 'u8[196608]{0}', space=vmem, size = 0x30000, scoped, tag = 'input window, operand 1, single buffered']
    #allocation6 [shape = 's32[1]{0}', space=sflag, size = 0x4, scoped, tag = 'scoped memory for mlp2_forward.1']
    #allocation7 [shape = 'u8[16384]{0}', space=vmem, size = 0x4000, scoped, tag = 'input window, operand 2, single buffered']
    #allocation8 [shape = 'u8[32768]{0}', space=vmem, size = 0x8000, scoped, tag = 'output window, operand 0']
    %8 = vsyncpa [#allocation3], 0
    %s9 = scalar_lea.sflag [#allocation3], 1
    %10 = vsyncpa %s9, 0
    %11 = vsyncpa [#allocation6], 0
    %12 = vsyncpa [#allocation4], 0
    %s13 = scalar_lea.sflag [#allocation4], 1
    %14 = vsyncpa %s13, 0
    loop: start=0, step=1, limit=4
    $region2: #{mlp2_forward.1} parent=1 // loop_pre_header
      _
    $region3: #{mlp2_forward.1} parent=1 // loop_header
      %s16 = sphi 0, %s20
      %p17 = scmp.ge.s32.totalorder %s16, 4
      %s26 = sphi 0, %s28
      %s29 = sphi 0, %s26
      %s30 = sphi 0, %s29
      %s46 = sphi 0, %s30
      %s50 = sphi 0, %s50
      %s52 = sphi 0, %s50
      %s53 = sphi 0, %s52
      %s67 = sphi 0, %s53
      %s71 = sphi 0, %s71
      %s73 = sphi 0, %s71
      %s74 = sphi 0, %s73
      %s88 = sphi 0, %s74
      %s94 = sphi 0, %s96
      %s97 = sphi 0, %s94
      %s98 = sphi 0, %s97
      %s114 = sphi 0, %s98
    $region4: #{mlp2_forward.1} parent=1 // loop_header_branch
      %19 = sbr.rel (%p17) target = $region8
    $region5: #{mlp2_forward.1} parent=1 // loop_body
      %s21 = ssub.s32 %s16, 1
      %s22 = ssub.s32 %s16, 2
      %s23 = sadd.s32 %s16, 1
      %s24 = ssub.s32 %s16, %s23
      %p25 = scmp.eq.s32.totalorder %s24, 0
      %s27 = sadd.s32 %s26, 1
      %s28 = scalar_select %p25, %s26, %s27
      %p31 = pneg %p25
      %p32 = scmp.eq.s32.totalorder %s16, 1
      %p33 = por %p31, %p32
      %p34 = scmp.ne.s32.totalorder %s26, %s29
      %p35 = scmp.eq.s32.totalorder %s16, 0
      %p36 = por %p34, %p35
      %p37 = scmp.ne.s32.totalorder %s26, %s29
      %p38 = scmp.eq.s32.totalorder %s21, 1
      %p39 = por %p37, %p38
      %p40 = scmp.ne.s32.totalorder %s29, %s30
      %p41 = scmp.eq.s32.totalorder %s21, 0
      %p42 = por %p40, %p41
      %p43 = scmp.ne.s32.totalorder %s29, %s30
      %p44 = scmp.eq.s32.totalorder %s22, 1
      %p45 = por %p43, %p44
      %p47 = scmp.ne.s32.totalorder %s30, %s46
      %p48 = scmp.eq.s32.totalorder %s22, 0
      %p49 = por %p47, %p48
      %s51 = sadd.s32 %s50, 1
      %p54 = scmp.eq.s32.totalorder %s16, 1
      %p55 = scmp.ne.s32.totalorder %s50, %s52
      %p56 = scmp.eq.s32.totalorder %s16, 0
      %p57 = por %p55, %p56
      %p58 = scmp.ne.s32.totalorder %s50, %s52
      %p59 = scmp.eq.s32.totalorder %s21, 1
      %p60 = por %p58, %p59
      %p61 = scmp.ne.s32.totalorder %s52, %s53
      %p62 = scmp.eq.s32.totalorder %s21, 0
      %p63 = por %p61, %p62
      %p64 = scmp.ne.s32.totalorder %s52, %s53
      %p65 = scmp.eq.s32.totalorder %s22, 1
      %p66 = por %p64, %p65
      %p68 = scmp.ne.s32.totalorder %s53, %s67
      %p69 = scmp.eq.s32.totalorder %s22, 0
      %p70 = por %p68, %p69
      %s72 = sadd.s32 %s71, 1
      %p75 = scmp.eq.s32.totalorder %s16, 1
      %p76 = scmp.ne.s32.totalorder %s71, %s73
      %p77 = scmp.eq.s32.totalorder %s16, 0
      %p78 = por %p76, %p77
      %p79 = scmp.ne.s32.totalorder %s71, %s73
      %p80 = scmp.eq.s32.totalorder %s21, 1
      %p81 = por %p79, %p80
      %p82 = scmp.ne.s32.totalorder %s73, %s74
      %p83 = scmp.eq.s32.totalorder %s21, 0
      %p84 = por %p82, %p83
      %p85 = scmp.ne.s32.totalorder %s73, %s74
      %p86 = scmp.eq.s32.totalorder %s22, 1
      %p87 = por %p85, %p86
      %p89 = scmp.ne.s32.totalorder %s74, %s88
      %p90 = scmp.eq.s32.totalorder %s22, 0
      %p91 = por %p89, %p90
      %s92 = ssub.s32 %s16, %s23
      %p93 = scmp.eq.s32.totalorder %s92, 0
      %s95 = sadd.s32 %s94, 1
      %s96 = scalar_select %p93, %s94, %s95
      %p99 = pneg %p93
      %p100 = scmp.eq.s32.totalorder %s16, 1
      %p101 = por %p99, %p100
      %p102 = scmp.ne.s32.totalorder %s94, %s97
      %p103 = scmp.eq.s32.totalorder %s16, 0
      %p104 = por %p102, %p103
      %p105 = scmp.ne.s32.totalorder %s94, %s97
      %p106 = scmp.eq.s32.totalorder %s21, 1
      %p107 = por %p105, %p106
      %p108 = scmp.ne.s32.totalorder %s97, %s98
      %p109 = scmp.eq.s32.totalorder %s21, 0
      %p110 = por %p108, %p109
      %p111 = scmp.ne.s32.totalorder %s97, %s98
      %p112 = scmp.eq.s32.totalorder %s22, 1
      %p113 = por %p111, %p112
      %p115 = scmp.ne.s32.totalorder %s98, %s114
      %p116 = scmp.eq.s32.totalorder %s22, 0
      %p117 = por %p115, %p116
      %p118 = scmp.le.s32.totalorder 1, %s16
      %p119 = scmp.lt.s32.totalorder %s16, 3
      %p120 = pnand %p118, %p119
      %p121 = pneg %p120
      // Predicated region
      $region9: #{mlp2_forward.1} parent=5 // pred_check
        _
      $region10: #{mlp2_forward.1} parent=5 // pred_check_branch
        %123 = sbr.rel (%p120) target = $region12
      $region11: #{mlp2_forward.1} parent=5 // pred_region
        %s124 = ssub.s32 %s16, 1
        // Predicated region
        $region13: #{mlp2_forward.1} parent=11 // pred_check
          %p125 = pneg %p63
        $region14: #{mlp2_forward.1} parent=11 // pred_check_branch
          %127 = sbr.rel (%p125) target = $region16
        $region15: #{mlp2_forward.1} parent=11 // pred_region
          %s129 = ssub.s32 6144, 6144
          %130 = vsyncadd [#allocation6], %s129
          %s131 = sshll.u32 [#allocation5], 4
          %s132 = int_to_ptr.vmem [resolvable:$true] %s131
          %137 = dma.hbm_to_vmem [thread:$0]  %s1, 6144, %s132, [#allocation6], 768, 768, 48
        $region16: #{mlp2_forward.1} parent=11 // pred_fallthru
          _
        // Predicated region
        $region17: #{mlp2_forward.1} parent=11 // pred_check
          %p138 = pneg %p84
        $region18: #{mlp2_forward.1} parent=11 // pred_check_branch
          %140 = sbr.rel (%p138) target = $region20
        $region19: #{mlp2_forward.1} parent=11 // pred_region
          %s142 = ssub.s32 512, 512
          %143 = vsyncadd [#allocation6], %s142
          %s144 = sshll.u32 [#allocation7], 4
          %s145 = int_to_ptr.vmem [resolvable:$true] %s144
          %150 = dma.hbm_to_vmem [thread:$0]  %s2, 512, %s145, [#allocation6], 128, 128, 8
        $region20: #{mlp2_forward.1} parent=11 // pred_fallthru
          _
      $region12: #{mlp2_forward.1} parent=5 // pred_fallthru
        _
      %p151 = scmp.lt.s32.totalorder %s16, 2
      // Predicated region
      $region21: #{mlp2_forward.1} parent=5 // pred_check
        %p152 = pneg %p151
      $region22: #{mlp2_forward.1} parent=5 // pred_check_branch
        %154 = sbr.rel (%p152) target = $region24
      $region23: #{mlp2_forward.1} parent=5 // pred_region
        // Predicated region
        $region25: #{mlp2_forward.1} parent=23 // pred_check
          %p155 = pneg %p36
        $region26: #{mlp2_forward.1} parent=23 // pred_check_branch
          %157 = sbr.rel (%p155) target = $region28
        $region27: #{mlp2_forward.1} parent=23 // pred_region
          %s158 = sand.u32 %s26, 1
          %s159 = scalar_lea.sflag [#allocation3], %s158
          %s160 = sand.u32 %s26, 1
          %s161 = smul.addr %s160, 768
          %s162 = scalar_lea.vmem [#allocation2], %s161
          %s163 = smul.u32 16, %s16
          %s165 = ssub.s32 12288, 12288
          %166 = vsyncadd %s159, %s165
          %s167 = smul.addr %s163, 6
          %s168 = smul.addr %s167, 128
          %s169 = scalar_lea.hbm %s0, %s168
          %s170 = sshll.u32 %s162, 4
          %s171 = int_to_ptr.vmem [resolvable:$true] %s170
          %176 = dma.hbm_to_vmem [thread:$0]  %s169, 12288, %s171, %s159, 768, 768, 48
        $region28: #{mlp2_forward.1} parent=23 // pred_fallthru
          _
      $region24: #{mlp2_forward.1} parent=5 // pred_fallthru
        _
      %p177 = scmp.le.s32.totalorder 1, %s16
      %p178 = scmp.lt.s32.totalorder %s16, 3
      %p179 = pnand %p177, %p178
      %p180 = pneg %p179
      // Predicated region
      $region29: #{mlp2_forward.1} parent=5 // pred_check
        _
      $region30: #{mlp2_forward.1} parent=5 // pred_check_branch
        %182 = sbr.rel (%p179) target = $region32
      $region31: #{mlp2_forward.1} parent=5 // pred_region
        %s183 = ssub.s32 %s16, 1
        %s184 = sand.u32 %s29, 1
        %s185 = scalar_lea.sflag [#allocation3], %s184
        %s186 = sand.u32 %s29, 1
        %s187 = smul.addr %s186, 768
        %s188 = scalar_lea.vmem [#allocation2], %s187
        // Predicated region
        $region33: #{mlp2_forward.1} parent=31 // pred_check
          %p189 = pneg %p42
        $region34: #{mlp2_forward.1} parent=31 // pred_check_branch
          %191 = sbr.rel (%p189) target = $region36
        $region35: #{mlp2_forward.1} parent=31 // pred_region
          %192 = dma.done %s185, 12288
        $region36: #{mlp2_forward.1} parent=31 // pred_fallthru
          _
        // Predicated region
        $region37: #{mlp2_forward.1} parent=31 // pred_check
          %p193 = pneg %p63
        $region38: #{mlp2_forward.1} parent=31 // pred_check_branch
          %195 = sbr.rel (%p193) target = $region40
        $region39: #{mlp2_forward.1} parent=31 // pred_region
          %196 = dma.done [#allocation6], 6144
        $region40: #{mlp2_forward.1} parent=31 // pred_fallthru
          _
        // Predicated region
        $region41: #{mlp2_forward.1} parent=31 // pred_check
          %p197 = pneg %p84
        $region42: #{mlp2_forward.1} parent=31 // pred_check_branch
          %199 = sbr.rel (%p197) target = $region44
        $region43: #{mlp2_forward.1} parent=31 // pred_region
          %200 = dma.done [#allocation6], 512
        $region44: #{mlp2_forward.1} parent=31 // pred_fallthru
          _
        %s201 = sand.u32 %s29, 1
        %s202 = scalar_lea.sflag [#allocation3], %s201
        %s203 = sand.u32 %s29, 1
        %s204 = smul.addr %s203, 768
        %s205 = scalar_lea.vmem [#allocation2], %s204
        %p206 = pneg %p42
        %p207 = pneg %p39
        %p208 = pneg %p63
        %p209 = pneg %p60
        %p210 = pneg %p84
        %p211 = pneg %p81
        %p212 = pneg %p110
        %p213 = pneg %p107
        %s214 = sand.u32 %s97, 1
        %s215 = scalar_lea.sflag [#allocation4], %s214
        %s216 = sand.u32 %s97, 1
        %s217 = smul.addr %s216, 32
        %s218 = scalar_lea.vmem [#allocation8], %s217
        %s219 = smul.u32 16, %s21
        %v221 = vld [vmem:[%s188] sm:$0xff]
        %v222 = vld [vmem:[%s188 + $0x8] sm:$0xff]
        %v223 = vld [vmem:[%s188 + $0x10] sm:$0xff]
        %v224 = vld [vmem:[%s188 + $0x18] sm:$0xff]
        %v225 = vld [vmem:[%s188 + $0x20] sm:$0xff]
        %v226 = vld [vmem:[%s188 + $0x28] sm:$0xff]
        %v227 = vld [vmem:[%s188 + $0x30] sm:$0xff]
        %v228 = vld [vmem:[%s188 + $0x38] sm:$0xff]
        %v229 = vld [vmem:[%s188 + $0x40] sm:$0xff]
        %v230 = vld [vmem:[%s188 + $0x48] sm:$0xff]
        %v231 = vld [vmem:[%s188 + $0x50] sm:$0xff]
        %v232 = vld [vmem:[%s188 + $0x58] sm:$0xff]
        %v233 = vld [vmem:[%s188 + $0x60] sm:$0xff]
        %v234 = vld [vmem:[%s188 + $0x68] sm:$0xff]
        %v235 = vld [vmem:[%s188 + $0x70] sm:$0xff]
        %v236 = vld [vmem:[%s188 + $0x78] sm:$0xff]
        %v237 = vld [vmem:[%s188 + $0x80] sm:$0xff]
        %v238 = vld [vmem:[%s188 + $0x88] sm:$0xff]
        %v239 = vld [vmem:[%s188 + $0x90] sm:$0xff]
        %v240 = vld [vmem:[%s188 + $0x98] sm:$0xff]
        %v241 = vld [vmem:[%s188 + $0xa0] sm:$0xff]
        %v242 = vld [vmem:[%s188 + $0xa8] sm:$0xff]
        %v243 = vld [vmem:[%s188 + $0xb0] sm:$0xff]
        %v244 = vld [vmem:[%s188 + $0xb8] sm:$0xff]
        %v245 = vld [vmem:[%s188 + $0xc0] sm:$0xff]
        %v246 = vld [vmem:[%s188 + $0xc8] sm:$0xff]
        %v247 = vld [vmem:[%s188 + $0xd0] sm:$0xff]
        %v248 = vld [vmem:[%s188 + $0xd8] sm:$0xff]
        %v249 = vld [vmem:[%s188 + $0xe0] sm:$0xff]
        %v250 = vld [vmem:[%s188 + $0xe8] sm:$0xff]
        %v251 = vld [vmem:[%s188 + $0xf0] sm:$0xff]
        %v252 = vld [vmem:[%s188 + $0xf8] sm:$0xff]
        %v253 = vld [vmem:[%s188 + $0x100] sm:$0xff]
        %v254 = vld [vmem:[%s188 + $0x108] sm:$0xff]
        %v255 = vld [vmem:[%s188 + $0x110] sm:$0xff]
        %v256 = vld [vmem:[%s188 + $0x118] sm:$0xff]
        %v257 = vld [vmem:[%s188 + $0x120] sm:$0xff]
        %v258 = vld [vmem:[%s188 + $0x128] sm:$0xff]
        %v259 = vld [vmem:[%s188 + $0x130] sm:$0xff]
        %v260 = vld [vmem:[%s188 + $0x138] sm:$0xff]
        %v261 = vld [vmem:[%s188 + $0x140] sm:$0xff]
        %v262 = vld [vmem:[%s188 + $0x148] sm:$0xff]
        %v263 = vld [vmem:[%s188 + $0x150] sm:$0xff]
        %v264 = vld [vmem:[%s188 + $0x158] sm:$0xff]
        %v265 = vld [vmem:[%s188 + $0x160] sm:$0xff]
        %v266 = vld [vmem:[%s188 + $0x168] sm:$0xff]
        %v267 = vld [vmem:[%s188 + $0x170] sm:$0xff]
        %v268 = vld [vmem:[%s188 + $0x178] sm:$0xff]
        %v269 = vld [vmem:[%s188 + $0x180] sm:$0xff]
        %v270 = vld [vmem:[%s188 + $0x188] sm:$0xff]
        %v271 = vld [vmem:[%s188 + $0x190] sm:$0xff]
        %v272 = vld [vmem:[%s188 + $0x198] sm:$0xff]
        %v273 = vld [vmem:[%s188 + $0x1a0] sm:$0xff]
        %v274 = vld [vmem:[%s188 + $0x1a8] sm:$0xff]
        %v275 = vld [vmem:[%s188 + $0x1b0] sm:$0xff]
        %v276 = vld [vmem:[%s188 + $0x1b8] sm:$0xff]
        %v277 = vld [vmem:[%s188 + $0x1c0] sm:$0xff]
        %v278 = vld [vmem:[%s188 + $0x1c8] sm:$0xff]
        %v279 = vld [vmem:[%s188 + $0x1d0] sm:$0xff]
        %v280 = vld [vmem:[%s188 + $0x1d8] sm:$0xff]
        %v281 = vld [vmem:[%s188 + $0x1e0] sm:$0xff]
        %v282 = vld [vmem:[%s188 + $0x1e8] sm:$0xff]
        %v283 = vld [vmem:[%s188 + $0x1f0] sm:$0xff]
        %v284 = vld [vmem:[%s188 + $0x1f8] sm:$0xff]
        %v285 = vld [vmem:[%s188 + $0x200] sm:$0xff]
        %v286 = vld [vmem:[%s188 + $0x208] sm:$0xff]
        %v287 = vld [vmem:[%s188 + $0x210] sm:$0xff]
        %v288 = vld [vmem:[%s188 + $0x218] sm:$0xff]
        %v289 = vld [vmem:[%s188 + $0x220] sm:$0xff]
        %v290 = vld [vmem:[%s188 + $0x228] sm:$0xff]
        %v291 = vld [vmem:[%s188 + $0x230] sm:$0xff]
        %v292 = vld [vmem:[%s188 + $0x238] sm:$0xff]
        %v293 = vld [vmem:[%s188 + $0x240] sm:$0xff]
        %v294 = vld [vmem:[%s188 + $0x248] sm:$0xff]
        %v295 = vld [vmem:[%s188 + $0x250] sm:$0xff]
        %v296 = vld [vmem:[%s188 + $0x258] sm:$0xff]
        %v297 = vld [vmem:[%s188 + $0x260] sm:$0xff]
        %v298 = vld [vmem:[%s188 + $0x268] sm:$0xff]
        %v299 = vld [vmem:[%s188 + $0x270] sm:$0xff]
        %v300 = vld [vmem:[%s188 + $0x278] sm:$0xff]
        %v301 = vld [vmem:[%s188 + $0x280] sm:$0xff]
        %v302 = vld [vmem:[%s188 + $0x288] sm:$0xff]
        %v303 = vld [vmem:[%s188 + $0x290] sm:$0xff]
        %v304 = vld [vmem:[%s188 + $0x298] sm:$0xff]
        %v305 = vld [vmem:[%s188 + $0x2a0] sm:$0xff]
        %v306 = vld [vmem:[%s188 + $0x2a8] sm:$0xff]
        %v307 = vld [vmem:[%s188 + $0x2b0] sm:$0xff]
        %v308 = vld [vmem:[%s188 + $0x2b8] sm:$0xff]
        %v309 = vld [vmem:[%s188 + $0x2c0] sm:$0xff]
        %v310 = vld [vmem:[%s188 + $0x2c8] sm:$0xff]
        %v311 = vld [vmem:[%s188 + $0x2d0] sm:$0xff]
        %v312 = vld [vmem:[%s188 + $0x2d8] sm:$0xff]
        %v313 = vld [vmem:[%s188 + $0x2e0] sm:$0xff]
        %v314 = vld [vmem:[%s188 + $0x2e8] sm:$0xff]
        %v315 = vld [vmem:[%s188 + $0x2f0] sm:$0xff]
        %v316 = vld [vmem:[%s188 + $0x2f8] sm:$0xff]
        %v317 = vpack.c.bf16 %v227, %v221
        %v318 = vpack.c.bf16 %v228, %v222
        %v319 = vpack.c.bf16 %v229, %v223
        %v320 = vpack.c.bf16 %v230, %v224
        %v321 = vpack.c.bf16 %v231, %v225
        %v322 = vpack.c.bf16 %v232, %v226
        %v323 = vpack.c.bf16 %v239, %v233
        %v324 = vpack.c.bf16 %v240, %v234
        %v325 = vpack.c.bf16 %v241, %v235
        %v326 = vpack.c.bf16 %v242, %v236
        %v327 = vpack.c.bf16 %v243, %v237
        %v328 = vpack.c.bf16 %v244, %v238
        %v329 = vpack.c.bf16 %v251, %v245
        %v330 = vpack.c.bf16 %v252, %v246
        %v331 = vpack.c.bf16 %v253, %v247
        %v332 = vpack.c.bf16 %v254, %v248
        %v333 = vpack.c.bf16 %v255, %v249
        %v334 = vpack.c.bf16 %v256, %v250
        %v335 = vpack.c.bf16 %v263, %v257
        %v336 = vpack.c.bf16 %v264, %v258
        %v337 = vpack.c.bf16 %v265, %v259
        %v338 = vpack.c.bf16 %v266, %v260
        %v339 = vpack.c.bf16 %v267, %v261
        %v340 = vpack.c.bf16 %v268, %v262
        %v341 = vpack.c.bf16 %v275, %v269
        %v342 = vpack.c.bf16 %v276, %v270
        %v343 = vpack.c.bf16 %v277, %v271
        %v344 = vpack.c.bf16 %v278, %v272
        %v345 = vpack.c.bf16 %v279, %v273
        %v346 = vpack.c.bf16 %v280, %v274
        %v347 = vpack.c.bf16 %v287, %v281
        %v348 = vpack.c.bf16 %v288, %v282
        %v349 = vpack.c.bf16 %v289, %v283
        %v350 = vpack.c.bf16 %v290, %v284
        %v351 = vpack.c.bf16 %v291, %v285
        %v352 = vpack.c.bf16 %v292, %v286
        %v353 = vpack.c.bf16 %v299, %v293
        %v354 = vpack.c.bf16 %v300, %v294
        %v355 = vpack.c.bf16 %v301, %v295
        %v356 = vpack.c.bf16 %v302, %v296
        %v357 = vpack.c.bf16 %v303, %v297
        %v358 = vpack.c.bf16 %v304, %v298
        %v359 = vpack.c.bf16 %v311, %v305
        %v360 = vpack.c.bf16 %v312, %v306
        %v361 = vpack.c.bf16 %v313, %v307
        %v362 = vpack.c.bf16 %v314, %v308
        %v363 = vpack.c.bf16 %v315, %v309
        %v364 = vpack.c.bf16 %v316, %v310
        %v365 = vld [vmem:[#allocation5] sm:$0xff]
        %v366 = vld [vmem:[#allocation5 + $0x8] sm:$0xff]
        %v367 = vld [vmem:[#allocation5 + $0x10] sm:$0xff]
        %v368 = vld [vmem:[#allocation5 + $0x18] sm:$0xff]
        %v369 = vld [vmem:[#allocation5 + $0x20] sm:$0xff]
        %v370 = vld [vmem:[#allocation5 + $0x28] sm:$0xff]
        %v371 = vld [vmem:[#allocation5 + $0x30] sm:$0xff]
        %v372 = vld [vmem:[#allocation5 + $0x38] sm:$0xff]
        %v373 = vld [vmem:[#allocation5 + $0x40] sm:$0xff]
        %v374 = vld [vmem:[#allocation5 + $0x48] sm:$0xff]
        %v375 = vld [vmem:[#allocation5 + $0x50] sm:$0xff]
        %v376 = vld [vmem:[#allocation5 + $0x58] sm:$0xff]
        %v377 = vld [vmem:[#allocation5 + $0x60] sm:$0xff]
        %v378 = vld [vmem:[#allocation5 + $0x68] sm:$0xff]
        %v379 = vld [vmem:[#allocation5 + $0x70] sm:$0xff]
        %v380 = vld [vmem:[#allocation5 + $0x78] sm:$0xff]
        %v381 = vld [vmem:[#allocation5 + $0x80] sm:$0xff]
        %v382 = vld [vmem:[#allocation5 + $0x88] sm:$0xff]
        %v383 = vld [vmem:[#allocation5 + $0x90] sm:$0xff]
        %v384 = vld [vmem:[#allocation5 + $0x98] sm:$0xff]
        %v385 = vld [vmem:[#allocation5 + $0xa0] sm:$0xff]
        %v386 = vld [vmem:[#allocation5 + $0xa8] sm:$0xff]
        %v387 = vld [vmem:[#allocation5 + $0xb0] sm:$0xff]
        %v388 = vld [vmem:[#allocation5 + $0xb8] sm:$0xff]
        %v389 = vld [vmem:[#allocation5 + $0xc0] sm:$0xff]
        %v390 = vld [vmem:[#allocation5 + $0xc8] sm:$0xff]
        %v391 = vld [vmem:[#allocation5 + $0xd0] sm:$0xff]
        %v392 = vld [vmem:[#allocation5 + $0xd8] sm:$0xff]
        %v393 = vld [vmem:[#allocation5 + $0xe0] sm:$0xff]
        %v394 = vld [vmem:[#allocation5 + $0xe8] sm:$0xff]
        %v395 = vld [vmem:[#allocation5 + $0xf0] sm:$0xff]
        %v396 = vld [vmem:[#allocation5 + $0xf8] sm:$0xff]
        %v397 = vld [vmem:[#allocation5 + $0x100] sm:$0xff]
        %v398 = vld [vmem:[#allocation5 + $0x108] sm:$0xff]
        %v399 = vld [vmem:[#allocation5 + $0x110] sm:$0xff]
        %v400 = vld [vmem:[#allocation5 + $0x118] sm:$0xff]
        %v401 = vld [vmem:[#allocation5 + $0x120] sm:$0xff]
        %v402 = vld [vmem:[#allocation5 + $0x128] sm:$0xff]
        %v403 = vld [vmem:[#allocation5 + $0x130] sm:$0xff]
        %v404 = vld [vmem:[#allocation5 + $0x138] sm:$0xff]
        %v405 = vld [vmem:[#allocation5 + $0x140] sm:$0xff]
        %v406 = vld [vmem:[#allocation5 + $0x148] sm:$0xff]
        %v407 = vld [vmem:[#allocation5 + $0x150] sm:$0xff]
        %v408 = vld [vmem:[#allocation5 + $0x158] sm:$0xff]
        %v409 = vld [vmem:[#allocation5 + $0x160] sm:$0xff]
        %v410 = vld [vmem:[#allocation5 + $0x168] sm:$0xff]
        %v411 = vld [vmem:[#allocation5 + $0x170] sm:$0xff]
        %v412 = vld [vmem:[#allocation5 + $0x178] sm:$0xff]
        %v413 = vpack.c.bf16 %v371, %v365
        %v414 = vpack.c.bf16 %v372, %v366
        %v415 = vpack.c.bf16 %v373, %v367
        %v416 = vpack.c.bf16 %v374, %v368
        %v417 = vpack.c.bf16 %v375, %v369
        %v418 = vpack.c.bf16 %v376, %v370
        %v419 = vpack.c.bf16 %v383, %v377
        %v420 = vpack.c.bf16 %v384, %v378
        %v421 = vpack.c.bf16 %v385, %v379
        %v422 = vpack.c.bf16 %v386, %v380
        %v423 = vpack.c.bf16 %v387, %v381
        %v424 = vpack.c.bf16 %v388, %v382
        %v425 = vpack.c.bf16 %v395, %v389
        %v426 = vpack.c.bf16 %v396, %v390
        %v427 = vpack.c.bf16 %v397, %v391
        %v428 = vpack.c.bf16 %v398, %v392
        %v429 = vpack.c.bf16 %v399, %v393
        %v430 = vpack.c.bf16 %v400, %v394
        %v431 = vpack.c.bf16 %v407, %v401
        %v432 = vpack.c.bf16 %v408, %v402
        %v433 = vpack.c.bf16 %v409, %v403
        %v434 = vpack.c.bf16 %v410, %v404
        %v435 = vpack.c.bf16 %v411, %v405
        %v436 = vpack.c.bf16 %v412, %v406
        %v437 = vld [vmem:[#allocation7] sm:$0xff]
        %v438 = vld [vmem:[#allocation7 + $0x8] sm:$0xff]
        %v439 = vld [vmem:[#allocation7 + $0x10] sm:$0xff]
        %v440 = vld [vmem:[#allocation7 + $0x18] sm:$0xff]
        %v441 = vpack.c.bf16 %v438, %v437
        %v442 = vpack.c.bf16 %v440, %v439
        %443 = vmatprep.subr.bf16.mxu0 %v360
        %444 = vmatpush1.bf16.xpose.msra.mxu0 %v359
        %445 = vmatprep.subr.bf16.mxu0 %v354
        %446 = vmatpush1.bf16.xpose.msra.mxu0 %v353
        %447 = vmatprep.subr.bf16.mxu0 %v348
        %448 = vmatpush1.bf16.xpose.msra.mxu0 %v347
        %449 = vmatprep.subr.bf16.mxu0 %v342
        %450 = vmatpush1.bf16.xpose.msra.mxu0 %v341
        %451 = vmatprep.subr.bf16.mxu0 %v336
        %452 = vmatpush1.bf16.xpose.msra.mxu0 %v335
        %453 = vmatprep.subr.bf16.mxu0 %v330
        %454 = vmatpush1.bf16.xpose.msra.mxu0 %v329
        %455 = vmatprep.subr.bf16.mxu0 %v324
        %456 = vmatpush1.bf16.xpose.msra.mxu0 %v323
        %457 = vmatprep.subr.bf16.mxu0 %v318
        %458 = vmatpush1.bf16.xpose.msra.mxu0 %v317
        %459 = vmatprep.subr.bf16.mxu0 0
        %460 = vmatpush2.bf16.xpose.msra.mxu0 0
        %461 = vmatprep.subr.bf16.mxu0 0
        %462 = vmatpush2.bf16.xpose.msra.mxu0 0
        %463 = vmatprep.subr.bf16.mxu0 0
        %464 = vmatpush2.bf16.xpose.msra.mxu0 0
        %465 = vmatprep.subr.bf16.mxu0 0
        %466 = vmatpush2.bf16.xpose.msra.mxu0 0
        %467 = vmatprep.subr.bf16.mxu0 0
        %468 = vmatpush2.bf16.xpose.msra.mxu0 0
        %469 = vmatprep.subr.bf16.mxu0 0
        %470 = vmatpush2.bf16.xpose.msra.mxu0 0
        %471 = vmatprep.subr.bf16.mxu0 0
        %472 = vmatpush2.bf16.xpose.msra.mxu0 0
        %473 = vmatprep.subr.bf16.mxu0 0
        %474 = vmatpush2.bf16.xpose.msra.mxu0 0
        %475 = vmatprep.mubr.bf16.mxu0 %v414
        %476 = vmatmul.mubr.bf16.gmra.mxu0 %v413
        %v477 = vpop.f32.mrf.mxu0
        %v478 = vadd.f32 0.0, %v477
        %v479 = vpop.f32.mrf.mxu0
        %v480 = vpop.f32.mrf.mxu0
        %v481 = vadd.f32 0.0, %v480
        %v482 = vpop.f32.mrf.mxu0
        %483 = vmatprep.mubr.bf16.mxu0 %v420
        %484 = vmatmul.mubr.bf16.gmra.mxu0 %v419
        %v485 = vpop.f32.mrf.mxu0
        %v486 = vadd.f32 0.0, %v485
        %v487 = vpop.f32.mrf.mxu0
        %v488 = vpop.f32.mrf.mxu0
        %v489 = vadd.f32 0.0, %v488
        %v490 = vpop.f32.mrf.mxu0
        %491 = vmatprep.mubr.bf16.mxu0 %v426
        %492 = vmatmul.mubr.bf16.gmra.mxu0 %v425
        %v493 = vpop.f32.mrf.mxu0
        %v494 = vadd.f32 0.0, %v493
        %v495 = vpop.f32.mrf.mxu0
        %v496 = vpop.f32.mrf.mxu0
        %v497 = vadd.f32 0.0, %v496
        %v498 = vpop.f32.mrf.mxu0
        %499 = vmatprep.mubr.bf16.mxu0 %v432
        %500 = vmatmul.mubr.bf16.gmra.mxu0 %v431
        %v501 = vpop.f32.mrf.mxu0
        %v502 = vadd.f32 0.0, %v501
        %v503 = vpop.f32.mrf.mxu0
        %v504 = vpop.f32.mrf.mxu0
        %v505 = vadd.f32 0.0, %v504
        %v506 = vpop.f32.mrf.mxu0
        %507 = vdwg.mxu0
        %508 = vmatprep.subr.bf16.mxu0 %v362
        %509 = vmatpush1.bf16.xpose.msra.mxu0 %v361
        %510 = vmatprep.subr.bf16.mxu0 %v356
        %511 = vmatpush1.bf16.xpose.msra.mxu0 %v355
        %512 = vmatprep.subr.bf16.mxu0 %v350
        %513 = vmatpush1.bf16.xpose.msra.mxu0 %v349
        %514 = vmatprep.subr.bf16.mxu0 %v344
        %515 = vmatpush1.bf16.xpose.msra.mxu0 %v343
        %516 = vmatprep.subr.bf16.mxu0 %v338
        %517 = vmatpush1.bf16.xpose.msra.mxu0 %v337
        %518 = vmatprep.subr.bf16.mxu0 %v332
        %519 = vmatpush1.bf16.xpose.msra.mxu0 %v331
        %520 = vmatprep.subr.bf16.mxu0 %v326
        %521 = vmatpush1.bf16.xpose.msra.mxu0 %v325
        %522 = vmatprep.subr.bf16.mxu0 %v320
        %523 = vmatpush1.bf16.xpose.msra.mxu0 %v319
        %524 = vmatprep.subr.bf16.mxu0 0
        %525 = vmatpush2.bf16.xpose.msra.mxu0 0
        %526 = vmatprep.subr.bf16.mxu0 0
        %527 = vmatpush2.bf16.xpose.msra.mxu0 0
        %528 = vmatprep.subr.bf16.mxu0 0
        %529 = vmatpush2.bf16.xpose.msra.mxu0 0
        %530 = vmatprep.subr.bf16.mxu0 0
        %531 = vmatpush2.bf16.xpose.msra.mxu0 0
        %532 = vmatprep.subr.bf16.mxu0 0
        %533 = vmatpush2.bf16.xpose.msra.mxu0 0
        %534 = vmatprep.subr.bf16.mxu0 0
        %535 = vmatpush2.bf16.xpose.msra.mxu0 0
        %536 = vmatprep.subr.bf16.mxu0 0
        %537 = vmatpush2.bf16.xpose.msra.mxu0 0
        %538 = vmatprep.subr.bf16.mxu0 0
        %539 = vmatpush2.bf16.xpose.msra.mxu0 0
        %540 = vmatprep.mubr.bf16.mxu0 %v416
        %541 = vmatmul.mubr.bf16.gmra.mxu0 %v415
        %v542 = vpop.f32.mrf.mxu0
        %v543 = vadd.f32 %v478, %v542
        %v544 = vpop.f32.mrf.mxu0
        %v545 = vpop.f32.mrf.mxu0
        %v546 = vadd.f32 %v481, %v545
        %v547 = vpop.f32.mrf.mxu0
        %548 = vmatprep.mubr.bf16.mxu0 %v422
        %549 = vmatmul.mubr.bf16.gmra.mxu0 %v421
        %v550 = vpop.f32.mrf.mxu0
        %v551 = vadd.f32 %v486, %v550
        %v552 = vpop.f32.mrf.mxu0
        %v553 = vpop.f32.mrf.mxu0
        %v554 = vadd.f32 %v489, %v553
        %v555 = vpop.f32.mrf.mxu0
        %556 = vmatprep.mubr.bf16.mxu0 %v428
        %557 = vmatmul.mubr.bf16.gmra.mxu0 %v427
        %v558 = vpop.f32.mrf.mxu0
        %v559 = vadd.f32 %v494, %v558
        %v560 = vpop.f32.mrf.mxu0
        %v561 = vpop.f32.mrf.mxu0
        %v562 = vadd.f32 %v497, %v561
        %v563 = vpop.f32.mrf.mxu0
        %564 = vmatprep.mubr.bf16.mxu0 %v434
        %565 = vmatmul.mubr.bf16.gmra.mxu0 %v433
        %v566 = vpop.f32.mrf.mxu0
        %v567 = vadd.f32 %v502, %v566
        %v568 = vpop.f32.mrf.mxu0
        %v569 = vpop.f32.mrf.mxu0
        %v570 = vadd.f32 %v505, %v569
        %v571 = vpop.f32.mrf.mxu0
        %572 = vdwg.mxu0
        %573 = vmatprep.subr.bf16.mxu0 %v364
        %574 = vmatpush1.bf16.xpose.msra.mxu0 %v363
        %575 = vmatprep.subr.bf16.mxu0 %v358
        %576 = vmatpush1.bf16.xpose.msra.mxu0 %v357
        %577 = vmatprep.subr.bf16.mxu0 %v352
        %578 = vmatpush1.bf16.xpose.msra.mxu0 %v351
        %579 = vmatprep.subr.bf16.mxu0 %v346
        %580 = vmatpush1.bf16.xpose.msra.mxu0 %v345
        %581 = vmatprep.subr.bf16.mxu0 %v340
        %582 = vmatpush1.bf16.xpose.msra.mxu0 %v339
        %583 = vmatprep.subr.bf16.mxu0 %v334
        %584 = vmatpush1.bf16.xpose.msra.mxu0 %v333
        %585 = vmatprep.subr.bf16.mxu0 %v328
        %586 = vmatpush1.bf16.xpose.msra.mxu0 %v327
        %587 = vmatprep.subr.bf16.mxu0 %v322
        %588 = vmatpush1.bf16.xpose.msra.mxu0 %v321
        %589 = vmatprep.subr.bf16.mxu0 0
        %590 = vmatpush2.bf16.xpose.msra.mxu0 0
        %591 = vmatprep.subr.bf16.mxu0 0
        %592 = vmatpush2.bf16.xpose.msra.mxu0 0
        %593 = vmatprep.subr.bf16.mxu0 0
        %594 = vmatpush2.bf16.xpose.msra.mxu0 0
        %595 = vmatprep.subr.bf16.mxu0 0
        %596 = vmatpush2.bf16.xpose.msra.mxu0 0
        %597 = vmatprep.subr.bf16.mxu0 0
        %598 = vmatpush2.bf16.xpose.msra.mxu0 0
        %599 = vmatprep.subr.bf16.mxu0 0
        %600 = vmatpush2.bf16.xpose.msra.mxu0 0
        %601 = vmatprep.subr.bf16.mxu0 0
        %602 = vmatpush2.bf16.xpose.msra.mxu0 0
        %603 = vmatprep.subr.bf16.mxu0 0
        %604 = vmatpush2.bf16.xpose.msra.mxu0 0
        %605 = vmatprep.mubr.bf16.mxu0 %v418
        %606 = vmatmul.mubr.bf16.gmra.mxu0 %v417
        %v607 = vpop.f32.mrf.mxu0
        %v608 = vadd.f32 %v543, %v607
        %v609 = vpop.f32.mrf.mxu0
        %v610 = vpop.f32.mrf.mxu0
        %v611 = vadd.f32 %v546, %v610
        %v612 = vpop.f32.mrf.mxu0
        %613 = vmatprep.mubr.bf16.mxu0 %v424
        %614 = vmatmul.mubr.bf16.gmra.mxu0 %v423
        %v615 = vpop.f32.mrf.mxu0
        %v616 = vadd.f32 %v551, %v615
        %v617 = vpop.f32.mrf.mxu0
        %v618 = vpop.f32.mrf.mxu0
        %v619 = vadd.f32 %v554, %v618
        %v620 = vpop.f32.mrf.mxu0
        %621 = vmatprep.mubr.bf16.mxu0 %v430
        %622 = vmatmul.mubr.bf16.gmra.mxu0 %v429
        %v623 = vpop.f32.mrf.mxu0
        %v624 = vadd.f32 %v559, %v623
        %v625 = vpop.f32.mrf.mxu0
        %v626 = vpop.f32.mrf.mxu0
        %v627 = vadd.f32 %v562, %v626
        %v628 = vpop.f32.mrf.mxu0
        %629 = vmatprep.mubr.bf16.mxu0 %v436
        %630 = vmatmul.mubr.bf16.gmra.mxu0 %v435
        %v631 = vpop.f32.mrf.mxu0
        %v632 = vadd.f32 %v567, %v631
        %v633 = vpop.f32.mrf.mxu0
        %v634 = vpop.f32.mrf.mxu0
        %v635 = vadd.f32 %v570, %v634
        %v636 = vpop.f32.mrf.mxu0
        %637 = vdwg.mxu0
        %v638 = vmax.f32 %v608, 0.0
        %v639 = vmax.f32 %v611, 0.0
        %v640 = vmax.f32 %v616, 0.0
        %v641 = vmax.f32 %v619, 0.0
        %v642 = vmax.f32 %v624, 0.0
        %v643 = vmax.f32 %v627, 0.0
        %v644 = vmax.f32 %v632, 0.0
        %v645 = vmax.f32 %v635, 0.0
        %v646 = vpack.c.bf16 %v639, %v638
        %v647 = vpack.c.bf16 %v641, %v640
        %v648 = vpack.c.bf16 %v643, %v642
        %v649 = vpack.c.bf16 %v645, %v644
        %vm650 = vcmask 523264
        %v652 = vsel %vm650, %v441, 0
        %v655 = vsel %vm650, %v442, 0
        %657 = vmatprep.subr.bf16.mxu0 0
        %658 = vmatpush1.bf16.msra.mxu0 0
        %659 = vmatprep.subr.bf16.mxu0 0
        %660 = vmatpush1.bf16.msra.mxu0 0
        %661 = vmatprep.subr.bf16.mxu0 0
        %662 = vmatpush1.bf16.msra.mxu0 0
        %663 = vmatprep.subr.bf16.mxu0 0
        %664 = vmatpush1.bf16.msra.mxu0 0
        %665 = vmatprep.subr.bf16.mxu0 0
        %666 = vmatpush1.bf16.msra.mxu0 %v649
        %667 = vmatprep.subr.bf16.mxu0 0
        %668 = vmatpush1.bf16.msra.mxu0 %v648
        %669 = vmatprep.subr.bf16.mxu0 0
        %670 = vmatpush1.bf16.msra.mxu0 %v647
        %671 = vmatprep.subr.bf16.mxu0 0
        %672 = vmatpush1.bf16.msra.mxu0 %v646
        %673 = vmatprep.subr.bf16.mxu0 0
        %674 = vmatpush2.bf16.msra.mxu0 0
        %675 = vmatprep.subr.bf16.mxu0 0
        %676 = vmatpush2.bf16.msra.mxu0 0
        %677 = vmatprep.subr.bf16.mxu0 0
        %678 = vmatpush2.bf16.msra.mxu0 0
        %679 = vmatprep.subr.bf16.mxu0 0
        %680 = vmatpush2.bf16.msra.mxu0 0
        %681 = vmatprep.subr.bf16.mxu0 0
        %682 = vmatpush2.bf16.msra.mxu0 0
        %683 = vmatprep.subr.bf16.mxu0 0
        %684 = vmatpush2.bf16.msra.mxu0 0
        %685 = vmatprep.subr.bf16.mxu0 0
        %686 = vmatpush2.bf16.msra.mxu0 0
        %687 = vmatprep.subr.bf16.mxu0 0
        %688 = vmatpush2.bf16.msra.mxu0 0
        %689 = vmatprep.mubr.bf16.mxu0 0
        %690 = vmatmul.mubr.bf16.gmra.mxu0 %v652
        %v691 = vpop.f32.mrf.mxu0
        %v692 = vadd.f32 0.0, %v691
        %v693 = vpop.f32.mrf.mxu0
        %v694 = vpop.f32.mrf.mxu0
        %v695 = vadd.f32 0.0, %v694
        %v696 = vpop.f32.mrf.mxu0
        %697 = vmatprep.mubr.bf16.mxu0 0
        %698 = vmatmul.mubr.bf16.gmra.mxu0 %v655
        %v699 = vpop.f32.mrf.mxu0
        %v700 = vadd.f32 0.0, %v699
        %v701 = vpop.f32.mrf.mxu0
        %v702 = vpop.f32.mrf.mxu0
        %v703 = vadd.f32 0.0, %v702
        %v704 = vpop.f32.mrf.mxu0
        %705 = vdwg.mxu0
        %706 = vst [vmem:[%s218] sm:$0xff] %v692
        %707 = vst [vmem:[%s218 + $0x8] sm:$0xff] %v695
        %708 = vst [vmem:[%s218 + $0x10] sm:$0xff] %v700
        %709 = vst [vmem:[%s218 + $0x18] sm:$0xff] %v703
        %s710 = sand.u32 %s97, 1
        %s711 = scalar_lea.sflag [#allocation4], %s710
        %s712 = sand.u32 %s97, 1
        %s713 = smul.addr %s712, 32
        %s714 = scalar_lea.vmem [#allocation8], %s713
        // Predicated region
        $region45: #{mlp2_forward.1} parent=31 // pred_check
          %p715 = pneg %p107
        $region46: #{mlp2_forward.1} parent=31 // pred_check_branch
          %717 = sbr.rel (%p715) target = $region48
        $region47: #{mlp2_forward.1} parent=31 // pred_region
          %s719 = ssub.s32 512, 512
          %720 = vsyncadd %s711, %s719
          %s721 = smul.addr %s21, 128
          %s722 = scalar_lea.hbm %s3, %s721
          %s723 = sshll.u32 %s714, 4
          %s724 = int_to_ptr.vmem [resolvable:$true] %s723
          %729 = dma.vmem_to_hbm [thread:$0]  %s724, 512, %s722, %s711, 128, 256, 8
        $region48: #{mlp2_forward.1} parent=31 // pred_fallthru
          _
      $region32: #{mlp2_forward.1} parent=5 // pred_fallthru
        _
      %p730 = scmp.le.s32.totalorder 2, %s16
      // Predicated region
      $region49: #{mlp2_forward.1} parent=5 // pred_check
        %p731 = pneg %p730
      $region50: #{mlp2_forward.1} parent=5 // pred_check_branch
        %733 = sbr.rel (%p731) target = $region52
      $region51: #{mlp2_forward.1} parent=5 // pred_region
        %s734 = ssub.s32 %s16, 2
        // Predicated region
        $region53: #{mlp2_forward.1} parent=51 // pred_check
          %p735 = pneg %p113
        $region54: #{mlp2_forward.1} parent=51 // pred_check_branch
          %737 = sbr.rel (%p735) target = $region56
        $region55: #{mlp2_forward.1} parent=51 // pred_region
          %s738 = sand.u32 %s98, 1
          %s739 = scalar_lea.sflag [#allocation4], %s738
          %s740 = sand.u32 %s98, 1
          %s741 = smul.addr %s740, 32
          %s742 = scalar_lea.vmem [#allocation8], %s741
          %743 = dma.done %s739, 512
        $region56: #{mlp2_forward.1} parent=51 // pred_fallthru
          _
      $region52: #{mlp2_forward.1} parent=5 // pred_fallthru
        _
    $region6: #{mlp2_forward.1} parent=1 // loop_footer
      %s20 = sadd.s32 1, %s16
    $region7: #{mlp2_forward.1} parent=1 // loop_footer_branch
      %15 = sbr.rel target = $region3
    $region8: #{mlp2_forward.1} parent=1 // loop_exit
      _
    %744 = vsyncpa [#allocation3], 1
    %s745 = scalar_lea.sflag [#allocation3], 1
    %746 = vsyncpa %s745, 1
    %747 = vsyncpa [#allocation6], 1
    %748 = vsyncpa [#allocation4], 1
    %s749 = scalar_lea.sflag [#allocation4], 1
    %750 = vsyncpa %s749, 1

</llo_original>
